<compile_context>
chip_gen: v7x
topology: tpu7x:2x2x1
jax: 0.10.0
libtpu: 0.0.40
codegen_flags: <defaults>
</compile_context>

<pallas_src>
import jax
import jax.numpy as jnp
from jax.experimental import pallas as pl
from jax.experimental.pallas import tpu as pltpu


# ----------------------------- in-kernel helpers -----------------------------

def _layernorm(x, scale, shift, eps=1e-5):
    # x: (rows, D) f32; scale/shift: (1, D) f32; unbiased=False variance.
    mean = jnp.mean(x, axis=-1, keepdims=True)
    var = jnp.mean((x - mean) ** 2, axis=-1, keepdims=True)
    return scale * ((x - mean) / jnp.sqrt(var + eps)) + shift


def _gelu_tanh(x):
    c = jnp.float32(0.7978845608028654)   # sqrt(2/pi)
    return 0.5 * x * (1.0 + jnp.tanh(c * (x + 0.044715 * (x * x * x))))


# --------------------------------- kernels ------------------------------------

def _ln_qkv_kernel(x_ref, ln_s_ref, ln_b_ref, wqkv_ref, qkv_ref):
    # x: (TR, D) f32; wqkv: (D, 3D) bf16 (q part pre-scaled by 1/sqrt(hd)).
    h = _layernorm(x_ref[...], ln_s_ref[...], ln_b_ref[...])
    qkv_ref[...] = jnp.dot(
        h.astype(jnp.bfloat16), wqkv_ref[...],
        preferred_element_type=jnp.float32,
    ).astype(qkv_ref.dtype)


def _flash_attn_kernel(q_ref, kT_ref, v_ref, o_ref, m_scr, l_scr, acc_scr):
    # q: (1,H,TQ,hd) bf16; kT: (1,H,hd,TK) bf16 (lane-dense T); v: (1,H,TK,hd) bf16.
    qi = pl.program_id(1)
    ki = pl.program_id(2)
    TQ = q_ref.shape[2]
    TK = kT_ref.shape[3]
    q0 = qi * TQ
    k0 = ki * TK

    @pl.when(ki == 0)
    def _init():
        m_scr[...] = jnp.full(m_scr.shape, -jnp.inf, jnp.float32)
        l_scr[...] = jnp.zeros(l_scr.shape, jnp.float32)
        acc_scr[...] = jnp.zeros(acc_scr.shape, jnp.float32)

    # Causal tile skipping: KV tiles strictly above the diagonal contribute nothing.
    @pl.when(k0 <= q0 + TQ - 1)
    def _tile():
        q = q_ref[0]                                               # (H, TQ, hd)
        kT = kT_ref[0]                                             # (H, hd, TK)
        v = v_ref[0]                                               # (H, TK, hd)
        s = jnp.einsum("hqd,hdk->hqk", q, kT,
                       preferred_element_type=jnp.float32)         # (H, TQ, TK) f32
        row = q0 + jax.lax.broadcasted_iota(jnp.int32, (TQ, TK), 0)
        col = k0 + jax.lax.broadcasted_iota(jnp.int32, (TQ, TK), 1)
        s = jnp.where((col <= row)[None], s, jnp.float32(-1e30))   # safe vs. -inf rows

        m_prev = m_scr[...]                                        # (H, TQ, 1)
        m_new = jnp.maximum(m_prev, jnp.max(s, axis=-1, keepdims=True))
        alpha = jnp.exp(m_prev - m_new)
        p = jnp.exp(s - m_new)
        l_scr[...] = alpha * l_scr[...] + jnp.sum(p, axis=-1, keepdims=True)
        acc_scr[...] = alpha * acc_scr[...] + jnp.einsum(
            "hqk,hkd->hqd", p.astype(v.dtype), v,
            preferred_element_type=jnp.float32)
        m_scr[...] = m_new

    @pl.when(ki == pl.num_programs(2) - 1)
    def _finalize():
        inv = pl.reciprocal(l_scr[...], approx=False)              # exact EUP recip
        o_ref[0] = (acc_scr[...] * inv).astype(o_ref.dtype)


def _outproj_ffn_kernel(x_ref, ctx_ref, wo_ref, bo_ref, ln2_s_ref, ln2_b_ref,
                        w1_ref, b1_ref, w2_ref, b2_ref, o_ref):
    # Output projection with the head reduction folded into the MXU contraction.
    attn = jnp.dot(ctx_ref[...], wo_ref[...],
                   preferred_element_type=jnp.float32) + bo_ref[...]
    x1 = x_ref[...] + attn                                          # residual 1 (f32)

    h2 = _layernorm(x1, ln2_s_ref[...], ln2_b_ref[...])
    # NOTE: for very large emb_dim on v7x the FFN hidden dim could additionally be
    # streamed in chunks; not needed at these sizes.
    ff = jnp.dot(h2.astype(jnp.bfloat16), w1_ref[...],
                 preferred_element_type=jnp.float32) + b1_ref[...]
    ff = _gelu_tanh(ff)
    ff = jnp.dot(ff.astype(jnp.bfloat16), w2_ref[...],
                 preferred_element_type=jnp.float32) + b2_ref[...]

    o_ref[...] = (x1 + ff).astype(o_ref.dtype)                      # residual 2


# -------------------------------- wrapper ------------------------------------

def _vmem_limit_bytes(frac=0.8):
    # Generation-aware VMEM budget with ~20% headroom (v5e/v6e: 128 MiB, v7x: 64 MiB).
    try:
        return int(pltpu.get_tpu_info().vmem_capacity_bytes * frac)
    except Exception:
        return 64 * 1024 * 1024


def _const_spec(shape, single_buffer):
    index_map = lambda *_: (0,) * len(shape)
    if single_buffer:
        # Constant-index weights never re-DMA; single-buffer them to halve their
        # resident VMEM footprint.
        return pl.BlockSpec(shape, index_map, pipeline_mode=pl.Buffered(1))
    return pl.BlockSpec(shape, index_map)


def _forward(x, params, num_heads, *, q_tile, kv_tile, row_tile, single_buffer_weights):
    (wq, wk, wv, wo, bo, ln1_s, ln1_b, ln2_s, ln2_b, w1, b1, w2, b2) = params
    B, T, D = x.shape
    H = num_heads
    hd = D // H
    H4 = w1.shape[1]
    bf16 = jnp.bfloat16

    # Trace-time weight prep (free): fold 1/sqrt(hd) into Wq, fuse QKV into one
    # (D, 3D) matrix, cast matmul weights to bf16.  Biases / LN params stay f32.
    scale = 1.0 / float(hd) ** 0.5
    wqkv = jnp.concatenate([wq * scale, wk, wv], axis=1).astype(bf16)   # (D, 3D)
    wo_b, w1_b, w2_b = wo.astype(bf16), w1.astype(bf16), w2.astype(bf16)

    vmem_limit = _vmem_limit_bytes()

    R = B * T
    # TODO(synk): non-divisible T / R fall back to a single full-extent tile; padded +
    #             masked tail tiles would be needed for arbitrary lengths at scale.
    TR = row_tile if R % row_tile == 0 else R
    TQ = q_tile if T % q_tile == 0 else T
    TK = kv_tile if T % kv_tile == 0 else T

    cspec = lambda shape: _const_spec(shape, single_buffer_weights)

    # ---- Kernel 1: LN1 + fused full-width QKV projection --------------------
    x2d = x.reshape(R, D)
    qkv = pl.pallas_call(
        _ln_qkv_kernel,
        out_shape=jax.ShapeDtypeStruct((R, 3 * D), bf16),
        grid_spec=pltpu.PrefetchScalarGridSpec(
            num_scalar_prefetch=0,
            grid=(R // TR,),
            in_specs=[
                pl.BlockSpec((TR, D), lambda i: (i, 0)),
                cspec((1, D)),            # ln1 scale
                cspec((1, D)),            # ln1 shift
                cspec((D, 3 * D)),        # fused Wqkv (bf16)
            ],
            out_specs=pl.BlockSpec((TR, 3 * D), lambda i: (i, 0)),
        ),
        compiler_params=pltpu.CompilerParams(
            dimension_semantics=("parallel",),
            vmem_limit_bytes=vmem_limit),
    )(x2d, ln1_s, ln1_b, wqkv)

    # Head split / K transpose: XLA-level layout plumbing (outside the kernels).
    q = qkv[:, :D].reshape(B, T, H, hd).transpose(0, 2, 1, 3)        # (B,H,T,hd)
    kT = qkv[:, D:2 * D].reshape(B, T, H, hd).transpose(0, 2, 3, 1)  # (B,H,hd,T)
    v = qkv[:, 2 * D:].reshape(B, T, H, hd).transpose(0, 2, 1, 3)    # (B,H,T,hd)

    # ---- Kernel 2: flash attention (online softmax, causal tile skipping) ----
    n_q, n_kv = T // TQ, T // TK
    ctx = pl.pallas_call(
        _flash_attn_kernel,
        out_shape=jax.ShapeDtypeStruct((B, H, T, hd), bf16),
        grid_spec=pltpu.PrefetchScalarGridSpec(
            num_scalar_prefetch=0,
            grid=(B, n_q, n_kv),
            in_specs=[
                pl.BlockSpec((1, H, TQ, hd), lambda b, qi, ki: (b, 0, qi, 0)),
                pl.BlockSpec((1, H, hd, TK), lambda b, qi, ki: (b, 0, 0, ki)),
                pl.BlockSpec((1, H, TK, hd), lambda b, qi, ki: (b, 0, ki, 0)),
            ],
            out_specs=pl.BlockSpec((1, H, TQ, hd), lambda b, qi, ki: (b, 0, qi, 0)),
            scratch_shapes=[
                pltpu.VMEM((H, TQ, 1), jnp.float32),     # running max
                pltpu.VMEM((H, TQ, 1), jnp.float32),     # running sum
                pltpu.VMEM((H, TQ, hd), jnp.float32),    # running weighted acc
            ],
        ),
        compiler_params=pltpu.CompilerParams(
            dimension_semantics=("parallel", "parallel", "arbitrary"),
            vmem_limit_bytes=vmem_limit),
    )(q, kT, v)

    # Head merge (XLA-level): (B,H,T,hd) -> (B*T, D), lane-dense for kernel 3.
    ctx2d = ctx.transpose(0, 2, 1, 3).reshape(R, D)

    # ---- Kernel 3: out-proj + residual + LN2 + FFN + residual ----------------
    out2d = pl.pallas_call(
        _outproj_ffn_kernel,
        out_shape=jax.ShapeDtypeStruct((R, D), x.dtype),
        grid_spec=pltpu.PrefetchScalarGridSpec(
            num_scalar_prefetch=0,
            grid=(R // TR,),
            in_specs=[
                pl.BlockSpec((TR, D), lambda i: (i, 0)),   # x rows (residual)
                pl.BlockSpec((TR, D), lambda i: (i, 0)),   # ctx rows (bf16)
                cspec((D, D)),                              # wo
                cspec((1, D)),                              # bo
                cspec((1, D)),                              # ln2 scale
                cspec((1, D)),                              # ln2 shift
                cspec((D, H4)),                             # ff w1
                cspec((1, H4)),                             # ff b1
                cspec((H4, D)),                             # ff w2
                cspec((1, D)),                              # ff b2
            ],
            out_specs=pl.BlockSpec((TR, D), lambda i: (i, 0)),
        ),
        compiler_params=pltpu.CompilerParams(
            dimension_semantics=("parallel",),
            vmem_limit_bytes=vmem_limit),
    )(x2d, ctx2d, wo_b, bo, ln2_s, ln2_b, w1_b, b1, w2_b, b2)

    return out2d.reshape(B, T, D)


def transformer_block(x, params, num_heads, *, q_tile=128, kv_tile=512, row_tile=256):
    try:
        return _forward(x, params, num_heads, q_tile=q_tile, kv_tile=kv_tile,
                        row_tile=row_tile, single_buffer_weights=True)
    except Exception:
        # Some jax versions may reject pl.Buffered(1) on pipelined BlockSpecs;
        # retry with default (double) buffering — numerics are identical.
        return _forward(x, params, num_heads, q_tile=q_tile, kv_tile=kv_tile,
                        row_tile=row_tile, single_buffer_weights=False)


# ------------------------- pure-JAX reference (check) -------------------------

def ref_transformer_block(x, params, num_heads):
    (wq, wk, wv, wo, bo, ln1_s, ln1_b, ln2_s, ln2_b, w1, b1, w2, b2) = params
    B, T, D = x.shape
    hd = D // num_heads

    def ln(z, s, sh):
        m = z.mean(-1, keepdims=True)
        v = ((z - m) ** 2).mean(-1, keepdims=True)
        return s * (z - m) / jnp.sqrt(v + 1e-5) + sh

    h = ln(x, ln1_s, ln1_b)
    q = (h @ wq).reshape(B, T, num_heads, hd).transpose(0, 2, 1, 3)
    k = (h @ wk).reshape(B, T, num_heads, hd).transpose(0, 2, 1, 3)
    v = (h @ wv).reshape(B, T, num_heads, hd).transpose(0, 2, 1, 3)
    scores = jnp.einsum("bhqd,bhkd->bhqk", q, k) / jnp.sqrt(jnp.float32(hd))
    mask = jnp.tril(jnp.ones((T, T), dtype=bool))
    scores = jnp.where(mask, scores, -jnp.inf)
    p = jax.nn.softmax(scores, axis=-1)
    ctx = jnp.einsum("bhqk,bhkd->bhqd", p, v).transpose(0, 2, 1, 3).reshape(B, T, D)
    x1 = x + (ctx @ wo + bo)

    h2 = ln(x1, ln2_s, ln2_b)
    f = h2 @ w1 + b1
    f = 0.5 * f * (1.0 + jnp.tanh(jnp.sqrt(2.0 / jnp.pi) * (f + 0.044715 * f ** 3)))
    f = f @ w2 + b2
    return x1 + f


# ---------------------------------- main --------------------------------------

if __name__ == "__main__":
    cfg = dict(emb_dim=32, context_length=8, n_heads=4, drop_rate=0.0, qkv_bias=False)
    B, T, D = 2, cfg["context_length"], cfg["emb_dim"]
    H4 = 4 * D

    key = jax.random.PRNGKey(0)
    ks = jax.random.split(key, 12)

    def init(k, shape, std=0.02):
        return (std * jax.random.normal(k, shape)).astype(jnp.float32)

    wq = init(ks[0], (D, D))
    wk = init(ks[1], (D, D))
    wv = init(ks[2], (D, D))
    wo = init(ks[3], (D, D))
    bo = init(ks[4], (1, D))
    ln1_s = jnp.ones((1, D), jnp.float32)
    ln1_b = jnp.zeros((1, D), jnp.float32)
    ln2_s = jnp.ones((1, D), jnp.float32)
    ln2_b = jnp.zeros((1, D), jnp.float32)
    w1 = init(ks[5], (D, H4))
    b1 = init(ks[6], (1, H4))
    w2 = init(ks[7], (H4, D))
    b2 = init(ks[8], (1, D))

    params = (wq, wk, wv, wo, bo, ln1_s, ln1_b, ln2_s, ln2_b, w1, b1, w2, b2)
    x = jax.random.normal(ks[9], (B, T, D), dtype=jnp.float32)

    out = jax.block_until_ready(transformer_block(x, params, cfg["n_heads"]))
    ref = ref_transformer_block(x, params, cfg["n_heads"])

    assert out.shape == (B, T, D)
    max_err = float(jnp.max(jnp.abs(out - ref)))
    # bf16 matmul operands vs. full-f32 reference -> loose tolerance.
    assert jnp.allclose(out, ref, atol=3e-2, rtol=3e-2), f"max_err={max_err}"

    print("KERNEL_OK")
</pallas_src>

<mosaic_0001>
module attributes {stable_mosaic.version = 11 : i64} {
  func.func @_ln_qkv_kernel(%arg0: i32, %arg1: memref<16x32xf32, #tpu.memory_space<vmem>>, %arg2: memref<1x32xf32, #tpu.memory_space<vmem>>, %arg3: memref<1x32xf32, #tpu.memory_space<vmem>>, %arg4: memref<32x96xbf16, #tpu.memory_space<vmem>>, %arg5: memref<16x96xbf16, #tpu.memory_space<vmem>>) attributes {dimension_semantics = [#tpu.dimension_semantics<parallel>], iteration_bounds = array<i64: 1>, scalar_prefetch = 0 : i64, scratch_operands = 0 : i64, tpu.core_type = #tpu.core_type<tc>, window_params = [{transform_indices = @transform_0, window_bounds = array<i64: 16, 32>}, {pipeline_mode = #tpu.pipeline_mode<synchronous>, transform_indices = @transform_1, window_bounds = array<i64: 1, 32>}, {pipeline_mode = #tpu.pipeline_mode<synchronous>, transform_indices = @transform_2, window_bounds = array<i64: 1, 32>}, {pipeline_mode = #tpu.pipeline_mode<synchronous>, transform_indices = @transform_3, window_bounds = array<i64: 32, 96>}, {transform_indices = @transform_4, window_bounds = array<i64: 16, 96>}]} {
    %c0 = arith.constant 0 : index
    %c0_0 = arith.constant 0 : index
    %0 = vector.load %arg1[%c0, %c0_0] : memref<16x32xf32, #tpu.memory_space<vmem>>, vector<16x32xf32>
    %c0_1 = arith.constant 0 : index
    %c0_2 = arith.constant 0 : index
    %1 = vector.load %arg2[%c0_1, %c0_2] : memref<1x32xf32, #tpu.memory_space<vmem>>, vector<1x32xf32>
    %c0_3 = arith.constant 0 : index
    %c0_4 = arith.constant 0 : index
    %2 = vector.load %arg3[%c0_3, %c0_4] : memref<1x32xf32, #tpu.memory_space<vmem>>, vector<1x32xf32>
    %cst = arith.constant dense<0.000000e+00> : vector<16xf32>
    %3 = vector.multi_reduction <add>, %0, %cst [1] : vector<16x32xf32> to vector<16xf32>
    %4 = vector.shape_cast %3 : vector<16xf32> to vector<16x1xf32>
    %cst_5 = arith.constant 3.200000e+01 : f32
    %5 = vector.broadcast %cst_5 : f32 to vector<16x1xf32>
    %6 = arith.divf %4, %5 : vector<16x1xf32>
    %7 = vector.broadcast %6 : vector<16x1xf32> to vector<16x32xf32>
    %8 = arith.subf %0, %7 : vector<16x32xf32>
    %9 = arith.mulf %8, %8 : vector<16x32xf32>
    %cst_6 = arith.constant dense<0.000000e+00> : vector<16xf32>
    %10 = vector.multi_reduction <add>, %9, %cst_6 [1] : vector<16x32xf32> to vector<16xf32>
    %11 = vector.shape_cast %10 : vector<16xf32> to vector<16x1xf32>
    %cst_7 = arith.constant 3.200000e+01 : f32
    %12 = vector.broadcast %cst_7 : f32 to vector<16x1xf32>
    %13 = arith.divf %11, %12 : vector<16x1xf32>
    %14 = vector.broadcast %6 : vector<16x1xf32> to vector<16x32xf32>
    %15 = arith.subf %0, %14 : vector<16x32xf32>
    %cst_8 = arith.constant 9.99999974E-6 : f32
    %16 = vector.broadcast %cst_8 : f32 to vector<16x1xf32>
    %17 = arith.addf %13, %16 : vector<16x1xf32>
    %18 = math.sqrt %17 : vector<16x1xf32>
    %19 = vector.broadcast %18 : vector<16x1xf32> to vector<16x32xf32>
    %20 = arith.divf %15, %19 : vector<16x32xf32>
    %21 = vector.broadcast %1 : vector<1x32xf32> to vector<16x32xf32>
    %22 = arith.mulf %21, %20 : vector<16x32xf32>
    %23 = vector.broadcast %2 : vector<1x32xf32> to vector<16x32xf32>
    %24 = arith.addf %22, %23 : vector<16x32xf32>
    %25 = arith.truncf %24 : vector<16x32xf32> to vector<16x32xbf16>
    %c0_9 = arith.constant 0 : index
    %c0_10 = arith.constant 0 : index
    %26 = vector.load %arg4[%c0_9, %c0_10] : memref<32x96xbf16, #tpu.memory_space<vmem>>, vector<32x96xbf16>
    %cst_11 = arith.constant dense<0.000000e+00> : vector<16x96xf32>
    %27 = tpu.matmul %25, %26, %cst_11 {dimension_numbers = #tpu.dot_dimension_numbers<[1], [0], [0], [1], [0, 0, 1, 1], [], []>} : vector<16x32xbf16>, vector<32x96xbf16>, vector<16x96xf32> -> vector<16x96xf32>
    %28 = arith.truncf %27 : vector<16x96xf32> to vector<16x96xbf16>
    %c0_12 = arith.constant 0 : index
    %c0_13 = arith.constant 0 : index
    %29 = vector.load %arg5[%c0_12, %c0_13] : memref<16x96xbf16, #tpu.memory_space<vmem>>, vector<16x96xbf16>
    tpu.vector_store %arg5[%c0_12, %c0_13], %28 {strides = array<i32>} : memref<16x96xbf16, #tpu.memory_space<vmem>>, vector<16x96xbf16>,
    return
  }
  func.func @transform_0(%arg0: i32) -> (i32, i32) {
    %c0_i32 = arith.constant 0 : i32
    %c0_i32_0 = arith.constant 0 : i32
    return %arg0, %c0_i32 : i32, i32
  }
  func.func @transform_1(%arg0: i32) -> (i32, i32) {
    %c0_i32 = arith.constant 0 : i32
    %c0_i32_0 = arith.constant 0 : i32
    %c0_i32_1 = arith.constant 0 : i32
    return %c0_i32, %c0_i32_0 : i32, i32
  }
  func.func @transform_2(%arg0: i32) -> (i32, i32) {
    %c0_i32 = arith.constant 0 : i32
    %c0_i32_0 = arith.constant 0 : i32
    %c0_i32_1 = arith.constant 0 : i32
    return %c0_i32, %c0_i32_0 : i32, i32
  }
  func.func @transform_3(%arg0: i32) -> (i32, i32) {
    %c0_i32 = arith.constant 0 : i32
    %c0_i32_0 = arith.constant 0 : i32
    %c0_i32_1 = arith.constant 0 : i32
    return %c0_i32, %c0_i32_0 : i32, i32
  }
  func.func @transform_4(%arg0: i32) -> (i32, i32) {
    %c0_i32 = arith.constant 0 : i32
    %c0_i32_0 = arith.constant 0 : i32
    return %arg0, %c0_i32 : i32, i32
  }
}

module attributes {stable_mosaic.version = 11 : i64} {
  func.func @_ln_qkv_kernel(%arg0: i32, %arg1: memref<16x32xf32, #tpu.memory_space<vmem>>, %arg2: memref<1x32xf32, #tpu.memory_space<vmem>>, %arg3: memref<1x32xf32, #tpu.memory_space<vmem>>, %arg4: memref<32x96xbf16, #tpu.memory_space<vmem>>, %arg5: memref<16x96xbf16, #tpu.memory_space<vmem>>) attributes {dimension_semantics = [#tpu.dimension_semantics<parallel>], iteration_bounds = array<i64: 1>, scalar_prefetch = 0 : i64, scratch_operands = 0 : i64, tpu.core_type = #tpu.core_type<tc>, window_params = [{transform_indices = @transform_0, window_bounds = array<i64: 16, 32>}, {pipeline_mode = #tpu.pipeline_mode<synchronous>, transform_indices = @transform_1, window_bounds = array<i64: 1, 32>}, {pipeline_mode = #tpu.pipeline_mode<synchronous>, transform_indices = @transform_2, window_bounds = array<i64: 1, 32>}, {pipeline_mode = #tpu.pipeline_mode<synchronous>, transform_indices = @transform_3, window_bounds = array<i64: 32, 96>}, {transform_indices = @transform_4, window_bounds = array<i64: 16, 96>}]} {
    %c0 = arith.constant 0 : index
    %c0_0 = arith.constant 0 : index
    %0 = vector.load %arg1[%c0, %c0_0] : memref<16x32xf32, #tpu.memory_space<vmem>>, vector<16x32xf32>
    %c0_1 = arith.constant 0 : index
    %c0_2 = arith.constant 0 : index
    %1 = vector.load %arg2[%c0_1, %c0_2] : memref<1x32xf32, #tpu.memory_space<vmem>>, vector<1x32xf32>
    %c0_3 = arith.constant 0 : index
    %c0_4 = arith.constant 0 : index
    %2 = vector.load %arg3[%c0_3, %c0_4] : memref<1x32xf32, #tpu.memory_space<vmem>>, vector<1x32xf32>
    %cst = arith.constant dense<0.000000e+00> : vector<16xf32>
    %3 = vector.multi_reduction <add>, %0, %cst [1] : vector<16x32xf32> to vector<16xf32>
    %4 = vector.shape_cast %3 : vector<16xf32> to vector<16x1xf32>
    %cst_5 = arith.constant 3.200000e+01 : f32
    %5 = vector.broadcast %cst_5 : f32 to vector<16x1xf32>
    %6 = arith.divf %4, %5 : vector<16x1xf32>
    %7 = vector.broadcast %6 : vector<16x1xf32> to vector<16x32xf32>
    %8 = arith.subf %0, %7 : vector<16x32xf32>
    %9 = arith.mulf %8, %8 : vector<16x32xf32>
    %cst_6 = arith.constant dense<0.000000e+00> : vector<16xf32>
    %10 = vector.multi_reduction <add>, %9, %cst_6 [1] : vector<16x32xf32> to vector<16xf32>
    %11 = vector.shape_cast %10 : vector<16xf32> to vector<16x1xf32>
    %cst_7 = arith.constant 3.200000e+01 : f32
    %12 = vector.broadcast %cst_7 : f32 to vector<16x1xf32>
    %13 = arith.divf %11, %12 : vector<16x1xf32>
    %14 = vector.broadcast %6 : vector<16x1xf32> to vector<16x32xf32>
    %15 = arith.subf %0, %14 : vector<16x32xf32>
    %cst_8 = arith.constant 9.99999974E-6 : f32
    %16 = vector.broadcast %cst_8 : f32 to vector<16x1xf32>
    %17 = arith.addf %13, %16 : vector<16x1xf32>
    %18 = math.sqrt %17 : vector<16x1xf32>
    %19 = vector.broadcast %18 : vector<16x1xf32> to vector<16x32xf32>
    %20 = arith.divf %15, %19 : vector<16x32xf32>
    %21 = vector.broadcast %1 : vector<1x32xf32> to vector<16x32xf32>
    %22 = arith.mulf %21, %20 : vector<16x32xf32>
    %23 = vector.broadcast %2 : vector<1x32xf32> to vector<16x32xf32>
    %24 = arith.addf %22, %23 : vector<16x32xf32>
    %25 = arith.truncf %24 : vector<16x32xf32> to vector<16x32xbf16>
    %c0_9 = arith.constant 0 : index
    %c0_10 = arith.constant 0 : index
    %26 = vector.load %arg4[%c0_9, %c0_10] : memref<32x96xbf16, #tpu.memory_space<vmem>>, vector<32x96xbf16>
    %cst_11 = arith.constant dense<0.000000e+00> : vector<16x96xf32>
    %27 = tpu.matmul %25, %26, %cst_11 {dimension_numbers = #tpu.dot_dimension_numbers<[1], [0], [0], [1], [0, 0, 1, 1], [], []>} : vector<16x32xbf16>, vector<32x96xbf16>, vector<16x96xf32> -> vector<16x96xf32>
    %28 = arith.truncf %27 : vector<16x96xf32> to vector<16x96xbf16>
    %c0_12 = arith.constant 0 : index
    %c0_13 = arith.constant 0 : index
    %29 = vector.load %arg5[%c0_12, %c0_13] : memref<16x96xbf16, #tpu.memory_space<vmem>>, vector<16x96xbf16>
    tpu.vector_store %arg5[%c0_12, %c0_13], %28 {strides = array<i32>} : memref<16x96xbf16, #tpu.memory_space<vmem>>, vector<16x96xbf16>,
    return
  }
  func.func @transform_0(%arg0: i32) -> (i32, i32) {
    %c0_i32 = arith.constant 0 : i32
    %c0_i32_0 = arith.constant 0 : i32
    return %arg0, %c0_i32 : i32, i32
  }
  func.func @transform_1(%arg0: i32) -> (i32, i32) {
    %c0_i32 = arith.constant 0 : i32
    %c0_i32_0 = arith.constant 0 : i32
    %c0_i32_1 = arith.constant 0 : i32
    return %c0_i32, %c0_i32_0 : i32, i32
  }
  func.func @transform_2(%arg0: i32) -> (i32, i32) {
    %c0_i32 = arith.constant 0 : i32
    %c0_i32_0 = arith.constant 0 : i32
    %c0_i32_1 = arith.constant 0 : i32
    return %c0_i32, %c0_i32_0 : i32, i32
  }
  func.func @transform_3(%arg0: i32) -> (i32, i32) {
    %c0_i32 = arith.constant 0 : i32
    %c0_i32_0 = arith.constant 0 : i32
    %c0_i32_1 = arith.constant 0 : i32
    return %c0_i32, %c0_i32_0 : i32, i32
  }
  func.func @transform_4(%arg0: i32) -> (i32, i32) {
    %c0_i32 = arith.constant 0 : i32
    %c0_i32_0 = arith.constant 0 : i32
    return %arg0, %c0_i32 : i32, i32
  }
}

</mosaic_0001>

<llo_original>
// kernel: tpu_custom_call.1
$region0: #{tpu_custom_call.1}
  #allocation0 [shape = 'u32[]', space=smem, size = 0x4, offset = 0x4, fixed_abs, tag = 'smem constant byte address 0x4 - core index']
  #allocation1 [shape = 'u32[144,128]{1,0:T(1,128)}', space=vmem, size = 0x12000, scoped, tag = 'internal scratch']
  %s0 = inlined_call_operand.hbm [shape: f32[16,32], index: 0, kind: input, shape index: {}]
  %s1 = inlined_call_operand.hbm [shape: f32[1,32], index: 1, kind: input, shape index: {}]
  %s2 = inlined_call_operand.hbm [shape: f32[1,32], index: 2, kind: input, shape index: {}]
  %s3 = inlined_call_operand.hbm [shape: bf16[32,96], index: 3, kind: input, shape index: {}]
  %s4 = inlined_call_operand.hbm [shape: bf16[16,96], index: 4, kind: output, shape index: {}]
  %s5 = sld [smem:[#allocation0]]
  $region42: #{tpu_custom_call.1} parent=0
    _
  %s7 = ssub.s32 1, %s5
  %s8 = scalar_select 0, %s7, %s5
  $region1: #{tpu_custom_call.1} parent=0
    #allocation2 [shape = 'u8[8192]{0}', space=vmem, size = 0x2000, scoped, tag = 'input window, operand 0, single buffered']
    #allocation3 [shape = 's32[1]{0}', space=sflag, size = 0x4, scoped, tag = 'scoped memory for tpu_custom_call.1']
    #allocation4 [shape = 's32[1]{0}', space=sflag, size = 0x4, scoped, tag = 'scoped memory for tpu_custom_call.1']
    #allocation5 [shape = 'u8[512]{0}', space=vmem, size = 0x400, scoped, tag = 'input window, operand 1, single buffered']
    #allocation6 [shape = 's32[1]{0}', space=sflag, size = 0x4, scoped, tag = 'scoped memory for tpu_custom_call.1']
    #allocation7 [shape = 'u8[512]{0}', space=vmem, size = 0x400, scoped, tag = 'input window, operand 2, single buffered']
    #allocation8 [shape = 'u8[8192]{0}', space=vmem, size = 0x2000, scoped, tag = 'input window, operand 3, single buffered']
    #allocation9 [shape = 's32[1]{0}', space=sflag, size = 0x4, scoped, tag = 'scoped memory for tpu_custom_call.1']
    #allocation10 [shape = 'u8[4096]{0}', space=vmem, size = 0x1000, scoped, tag = 'output window, operand 0, single buffered']
    %9 = vsyncpa [#allocation3], 0
    %10 = vsyncpa [#allocation6], 0
    %11 = vsyncpa [#allocation9], 0
    %12 = vsyncpa [#allocation4], 0
    // Predicated region
    $region2: #{tpu_custom_call.1} parent=1 // pred_check
      _
    $region3: #{tpu_custom_call.1} parent=1 // pred_check_branch
      %14 = sbr.rel (0) target = $region5
    $region4: #{tpu_custom_call.1} parent=1 // pred_region
      %s16 = ssub.s32 256, 256
      %17 = vsyncadd [#allocation3], %s16
      %s18 = sshll.u32 [#allocation2], 4
      %s19 = int_to_ptr.vmem [resolvable:$true] %s18
      %24 = dma.hbm_to_vmem [thread:$0]  %s0, 256, %s19, [#allocation3], 128, 128, 8
    $region5: #{tpu_custom_call.1} parent=1 // pred_fallthru
      _
    // Predicated region
    $region6: #{tpu_custom_call.1} parent=1 // pred_check
      _
    $region7: #{tpu_custom_call.1} parent=1 // pred_check_branch
      %26 = sbr.rel (0) target = $region9
    $region8: #{tpu_custom_call.1} parent=1 // pred_region
      %s28 = ssub.s32 16, 16
      %29 = vsyncadd [#allocation6], %s28
      %s31 = sshll.u32 [#allocation5], 4
      %s32 = int_to_ptr.vmem [resolvable:$true] %s31
      %34 = dma.hbm_to_vmem [thread:$0]  %s1, 16, %s32, [#allocation6]
    $region9: #{tpu_custom_call.1} parent=1 // pred_fallthru
      _
    // Predicated region
    $region10: #{tpu_custom_call.1} parent=1 // pred_check
      _
    $region11: #{tpu_custom_call.1} parent=1 // pred_check_branch
      %36 = sbr.rel (0) target = $region13
    $region12: #{tpu_custom_call.1} parent=1 // pred_region
      %s38 = ssub.s32 16, 16
      %39 = vsyncadd [#allocation6], %s38
      %s41 = sshll.u32 [#allocation7], 4
      %s42 = int_to_ptr.vmem [resolvable:$true] %s41
      %44 = dma.hbm_to_vmem [thread:$0]  %s2, 16, %s42, [#allocation6]
    $region13: #{tpu_custom_call.1} parent=1 // pred_fallthru
      _
    // Predicated region
    $region14: #{tpu_custom_call.1} parent=1 // pred_check
      _
    $region15: #{tpu_custom_call.1} parent=1 // pred_check_branch
      %46 = sbr.rel (0) target = $region17
    $region16: #{tpu_custom_call.1} parent=1 // pred_region
      %s48 = ssub.s32 256, 256
      %49 = vsyncadd [#allocation9], %s48
      %s50 = sshll.u32 [#allocation8], 4
      %s51 = int_to_ptr.vmem [resolvable:$true] %s50
      %56 = dma.hbm_to_vmem [thread:$0]  %s3, 256, %s51, [#allocation9], 64, 64, 4
    $region17: #{tpu_custom_call.1} parent=1 // pred_fallthru
      _
    // Predicated region
    $region18: #{tpu_custom_call.1} parent=1 // pred_check
      _
    $region19: #{tpu_custom_call.1} parent=1 // pred_check_branch
      %58 = sbr.rel (0) target = $region21
    $region20: #{tpu_custom_call.1} parent=1 // pred_region
      %59 = dma.done [#allocation3], 256
    $region21: #{tpu_custom_call.1} parent=1 // pred_fallthru
      _
    // Predicated region
    $region22: #{tpu_custom_call.1} parent=1 // pred_check
      _
    $region23: #{tpu_custom_call.1} parent=1 // pred_check_branch
      %61 = sbr.rel (0) target = $region25
    $region24: #{tpu_custom_call.1} parent=1 // pred_region
      %62 = dma.done [#allocation6], 16
    $region25: #{tpu_custom_call.1} parent=1 // pred_fallthru
      _
    // Predicated region
    $region26: #{tpu_custom_call.1} parent=1 // pred_check
      _
    $region27: #{tpu_custom_call.1} parent=1 // pred_check_branch
      %64 = sbr.rel (0) target = $region29
    $region28: #{tpu_custom_call.1} parent=1 // pred_region
      %65 = dma.done [#allocation6], 16
    $region29: #{tpu_custom_call.1} parent=1 // pred_fallthru
      _
    // Predicated region
    $region30: #{tpu_custom_call.1} parent=1 // pred_check
      _
    $region31: #{tpu_custom_call.1} parent=1 // pred_check_branch
      %67 = sbr.rel (0) target = $region33
    $region32: #{tpu_custom_call.1} parent=1 // pred_region
      %68 = dma.done [#allocation9], 256
    $region33: #{tpu_custom_call.1} parent=1 // pred_fallthru
      _
    %v70 = vld [vmem:[#allocation2] sm:$0xff]
    %v71 = vld [vmem:[#allocation2 + $0x8] sm:$0xff]
    %v72 = vld [vmem:[#allocation5] sm:$0x1]
    %v73 = vld [vmem:[#allocation7] sm:$0x1]
    %vm74 = vcmask 261120
    %v75 = vsel %vm74, %v70, 0.0
    %76 = vadd.xlane.f32.xlu0 %v75
    %v77 = vpop.xlane.xlu0 %76
    %v78 = vsel %vm74, %v71, 0.0
    %79 = vadd.xlane.f32.xlu0 %v78
    %v80 = vpop.xlane.xlu0 %79
    %v81 = vrcp.pop 32.0
    %v82 = vmul.f32 %v77, %v81
    %v83 = vmul.f32 %v80, %v81
    %v84 = vsub.f32 %v70, %v82
    %v85 = vsub.f32 %v71, %v83
    %v86 = vmul.f32 %v84, %v84
    %v87 = vmul.f32 %v85, %v85
    %v88 = vsel %vm74, %v86, 0.0
    %89 = vadd.xlane.f32.xlu0 %v88
    %v90 = vpop.xlane.xlu0 %89
    %v91 = vsel %vm74, %v87, 0.0
    %92 = vadd.xlane.f32.xlu0 %v91
    %v93 = vpop.xlane.xlu0 %92
    %v94 = vmul.f32 %v90, %v81
    %v95 = vmul.f32 %v93, %v81
    %v96 = vadd.f32 %v94, 1e-05
    %v97 = vadd.f32 %v95, 1e-05
    %v98 = vrsqrt.pop %v96
    %v99 = vmul.f32 %v96, %v98
    %vm100 = vcmp.eq.f32.partialorder %v96, inf
    %v101 = vsel %vm100, %v96, %v99
    %vm102 = vcmp.eq.f32.partialorder %v96, 0.0
    %v103 = vand.u32 %v96, 2147483648
    %v104 = vsel %vm102, %v103, %v101
    %v105 = vrsqrt.pop %v97
    %v106 = vmul.f32 %v97, %v105
    %vm107 = vcmp.eq.f32.partialorder %v97, inf
    %v108 = vsel %vm107, %v97, %v106
    %vm109 = vcmp.eq.f32.partialorder %v97, 0.0
    %v110 = vand.u32 %v97, 2147483648
    %v111 = vsel %vm109, %v110, %v108
    %v112 = vrcp.pop %v104
    %v113 = vmul.f32 %v84, %v112
    %v114 = vrcp.pop %v111
    %v115 = vmul.f32 %v85, %v114
    %v117 = vlaneseq
    %v118 = vshrl.u32 %v117, 7
    %v119 = vsub.s32 0, %v118
    %v120 = vrot.slane %v72, %v119
    %v122 = vmul.f32 %v120, %v113
    %v123 = vmul.f32 %v120, %v115
    %v125 = vlaneseq
    %v126 = vshrl.u32 %v125, 7
    %v127 = vsub.s32 0, %v126
    %v128 = vrot.slane %v73, %v127
    %v130 = vadd.f32 %v122, %v128
    %v131 = vadd.f32 %v123, %v128
    %v132 = vpack.c.bf16 %v131, %v130
    %v133 = vld [vmem:[#allocation8] sm:$0xf]
    %v134 = vld [vmem:[#allocation8 + $0x4] sm:$0xf]
    %v135 = vld [vmem:[#allocation8 + $0x8] sm:$0xf]
    %v136 = vld [vmem:[#allocation8 + $0xc] sm:$0xf]
    %v141 = vunpack.c.l.b16 %v133
    %v142 = vunpack.c.l.b16 %v134
    %v143 = vunpack.c.l.b16 %v135
    %v144 = vunpack.c.l.b16 %v136
    %v145 = vpack.c.b16 %v142, %v141
    %v146 = vpack.c.b16 %v144, %v143
    %v150 = vsel %vm74, %v132, 0
    %152 = vmatprep.subr.bf16.mxu0 0
    %153 = vmatpush1.bf16.msra.mxu0 %v145
    %154 = vmatprep.subr.bf16.mxu0 0
    %155 = vmatpush1.bf16.msra.mxu0 %v146
    %156 = vmatprep.subr.bf16.mxu0 0
    %157 = vmatpush1.bf16.msra.mxu0 0
    %158 = vmatprep.subr.bf16.mxu0 0
    %159 = vmatpush1.bf16.msra.mxu0 0
    %160 = vmatprep.subr.bf16.mxu0 0
    %161 = vmatpush1.bf16.msra.mxu0 0
    %162 = vmatprep.subr.bf16.mxu0 0
    %163 = vmatpush1.bf16.msra.mxu0 0
    %164 = vmatprep.subr.bf16.mxu0 0
    %165 = vmatpush1.bf16.msra.mxu0 0
    %166 = vmatprep.subr.bf16.mxu0 0
    %167 = vmatpush1.bf16.msra.mxu0 0
    %168 = vmatprep.subr.bf16.mxu0 0
    %169 = vmatpush1.bf16.msra.mxu0 0
    %170 = vmatprep.subr.bf16.mxu0 0
    %171 = vmatpush1.bf16.msra.mxu0 0
    %172 = vmatprep.subr.bf16.mxu0 0
    %173 = vmatpush1.bf16.msra.mxu0 0
    %174 = vmatprep.subr.bf16.mxu0 0
    %175 = vmatpush1.bf16.msra.mxu0 0
    %176 = vmatprep.subr.bf16.mxu0 0
    %177 = vmatpush1.bf16.msra.mxu0 0
    %178 = vmatprep.subr.bf16.mxu0 0
    %179 = vmatpush1.bf16.msra.mxu0 0
    %180 = vmatprep.subr.bf16.mxu0 0
    %181 = vmatpush1.bf16.msra.mxu0 0
    %182 = vmatprep.subr.bf16.mxu0 0
    %183 = vmatpush1.bf16.msra.mxu0 0
    %184 = vmatprep.mubr.bf16.mxu0 0
    %185 = vmatmul.mubr.bf16.gmra.mrb[0].mxu0 %v150
    %v186 = vpop.f32.mrb[0].mxu0
    %v187 = vadd.f32 0.0, %v186
    %v188 = vpop.f32.mrb[0].mxu0
    %v189 = vpop.f32.mrb[0].mxu0
    %v190 = vadd.f32 0.0, %v189
    %v191 = vpop.f32.mrb[0].mxu0
    %192 = vdwg.mxu0
    %v193 = vpack.c.bf16 %v190, %v187
    %v195 = vunpack.c.l.b16 %v193
    %v196 = vunpack.c.h.b16 %v193
    %v197 = vpack.c.b16 %v195, %v195
    %v198 = vpack.c.b16 %v196, %v196
    %vm201 = vcmask 781312
    %202 = vst.msk [vmem:[#allocation10] sm:$0xf] %vm201, %v197
    %203 = vst.msk [vmem:[#allocation10 + $0x4] sm:$0xf] %vm201, %v198
    // Predicated region
    $region34: #{tpu_custom_call.1} parent=1 // pred_check
      _
    $region35: #{tpu_custom_call.1} parent=1 // pred_check_branch
      %205 = sbr.rel (0) target = $region37
    $region36: #{tpu_custom_call.1} parent=1 // pred_region
      %s207 = ssub.s32 128, 128
      %208 = vsyncadd [#allocation4], %s207
      %s209 = sshll.u32 [#allocation10], 4
      %s210 = int_to_ptr.vmem [resolvable:$true] %s209
      %215 = dma.vmem_to_hbm [thread:$0]  %s210, 128, %s4, [#allocation4], 64, 64, 4
    $region37: #{tpu_custom_call.1} parent=1 // pred_fallthru
      _
    // Predicated region
    $region38: #{tpu_custom_call.1} parent=1 // pred_check
      _
    $region39: #{tpu_custom_call.1} parent=1 // pred_check_branch
      %217 = sbr.rel (0) target = $region41
    $region40: #{tpu_custom_call.1} parent=1 // pred_region
      %218 = dma.done [#allocation4], 128
    $region41: #{tpu_custom_call.1} parent=1 // pred_fallthru
      _
    %219 = vsyncpa [#allocation3], 1
    %220 = vsyncpa [#allocation6], 1
    %221 = vsyncpa [#allocation9], 1
    %222 = vsyncpa [#allocation4], 1

// kernel: tpu_custom_call.1
$region0: #{tpu_custom_call.1}
  #allocation0 [shape = 'u32[]', space=smem, size = 0x4, offset = 0x4, fixed_abs, tag = 'smem constant byte address 0x4 - core index']
  #allocation1 [shape = 'u32[144,128]{1,0:T(1,128)}', space=vmem, size = 0x12000, scoped, tag = 'internal scratch']
  %s0 = inlined_call_operand.hbm [shape: f32[16,32], index: 0, kind: input, shape index: {}]
  %s1 = inlined_call_operand.hbm [shape: f32[1,32], index: 1, kind: input, shape index: {}]
  %s2 = inlined_call_operand.hbm [shape: f32[1,32], index: 2, kind: input, shape index: {}]
  %s3 = inlined_call_operand.hbm [shape: bf16[32,96], index: 3, kind: input, shape index: {}]
  %s4 = inlined_call_operand.hbm [shape: bf16[16,96], index: 4, kind: output, shape index: {}]
  %s5 = sld [smem:[#allocation0]]
  $region42: #{tpu_custom_call.1} parent=0
    _
  %s7 = ssub.s32 1, %s5
  %s8 = scalar_select 0, %s7, %s5
  $region1: #{tpu_custom_call.1} parent=0
    #allocation2 [shape = 'u8[8192]{0}', space=vmem, size = 0x2000, scoped, tag = 'input window, operand 0, single buffered']
    #allocation3 [shape = 's32[1]{0}', space=sflag, size = 0x4, scoped, tag = 'scoped memory for tpu_custom_call.1']
    #allocation4 [shape = 's32[1]{0}', space=sflag, size = 0x4, scoped, tag = 'scoped memory for tpu_custom_call.1']
    #allocation5 [shape = 'u8[512]{0}', space=vmem, size = 0x400, scoped, tag = 'input window, operand 1, single buffered']
    #allocation6 [shape = 's32[1]{0}', space=sflag, size = 0x4, scoped, tag = 'scoped memory for tpu_custom_call.1']
    #allocation7 [shape = 'u8[512]{0}', space=vmem, size = 0x400, scoped, tag = 'input window, operand 2, single buffered']
    #allocation8 [shape = 'u8[8192]{0}', space=vmem, size = 0x2000, scoped, tag = 'input window, operand 3, single buffered']
    #allocation9 [shape = 's32[1]{0}', space=sflag, size = 0x4, scoped, tag = 'scoped memory for tpu_custom_call.1']
    #allocation10 [shape = 'u8[4096]{0}', space=vmem, size = 0x1000, scoped, tag = 'output window, operand 0, single buffered']
    %9 = vsyncpa [#allocation3], 0
    %10 = vsyncpa [#allocation6], 0
    %11 = vsyncpa [#allocation9], 0
    %12 = vsyncpa [#allocation4], 0
    // Predicated region
    $region2: #{tpu_custom_call.1} parent=1 // pred_check
      _
    $region3: #{tpu_custom_call.1} parent=1 // pred_check_branch
      %14 = sbr.rel (0) target = $region5
    $region4: #{tpu_custom_call.1} parent=1 // pred_region
      %s16 = ssub.s32 256, 256
      %17 = vsyncadd [#allocation3], %s16
      %s18 = sshll.u32 [#allocation2], 4
      %s19 = int_to_ptr.vmem [resolvable:$true] %s18
      %24 = dma.hbm_to_vmem [thread:$0]  %s0, 256, %s19, [#allocation3], 128, 128, 8
    $region5: #{tpu_custom_call.1} parent=1 // pred_fallthru
      _
    // Predicated region
    $region6: #{tpu_custom_call.1} parent=1 // pred_check
      _
    $region7: #{tpu_custom_call.1} parent=1 // pred_check_branch
      %26 = sbr.rel (0) target = $region9
    $region8: #{tpu_custom_call.1} parent=1 // pred_region
      %s28 = ssub.s32 16, 16
      %29 = vsyncadd [#allocation6], %s28
      %s31 = sshll.u32 [#allocation5], 4
      %s32 = int_to_ptr.vmem [resolvable:$true] %s31
      %34 = dma.hbm_to_vmem [thread:$0]  %s1, 16, %s32, [#allocation6]
    $region9: #{tpu_custom_call.1} parent=1 // pred_fallthru
      _
    // Predicated region
    $region10: #{tpu_custom_call.1} parent=1 // pred_check
      _
    $region11: #{tpu_custom_call.1} parent=1 // pred_check_branch
      %36 = sbr.rel (0) target = $region13
    $region12: #{tpu_custom_call.1} parent=1 // pred_region
      %s38 = ssub.s32 16, 16
      %39 = vsyncadd [#allocation6], %s38
      %s41 = sshll.u32 [#allocation7], 4
      %s42 = int_to_ptr.vmem [resolvable:$true] %s41
      %44 = dma.hbm_to_vmem [thread:$0]  %s2, 16, %s42, [#allocation6]
    $region13: #{tpu_custom_call.1} parent=1 // pred_fallthru
      _
    // Predicated region
    $region14: #{tpu_custom_call.1} parent=1 // pred_check
      _
    $region15: #{tpu_custom_call.1} parent=1 // pred_check_branch
      %46 = sbr.rel (0) target = $region17
    $region16: #{tpu_custom_call.1} parent=1 // pred_region
      %s48 = ssub.s32 256, 256
      %49 = vsyncadd [#allocation9], %s48
      %s50 = sshll.u32 [#allocation8], 4
      %s51 = int_to_ptr.vmem [resolvable:$true] %s50
      %56 = dma.hbm_to_vmem [thread:$0]  %s3, 256, %s51, [#allocation9], 64, 64, 4
    $region17: #{tpu_custom_call.1} parent=1 // pred_fallthru
      _
    // Predicated region
    $region18: #{tpu_custom_call.1} parent=1 // pred_check
      _
    $region19: #{tpu_custom_call.1} parent=1 // pred_check_branch
      %58 = sbr.rel (0) target = $region21
    $region20: #{tpu_custom_call.1} parent=1 // pred_region
      %59 = dma.done [#allocation3], 256
    $region21: #{tpu_custom_call.1} parent=1 // pred_fallthru
      _
    // Predicated region
    $region22: #{tpu_custom_call.1} parent=1 // pred_check
      _
    $region23: #{tpu_custom_call.1} parent=1 // pred_check_branch
      %61 = sbr.rel (0) target = $region25
    $region24: #{tpu_custom_call.1} parent=1 // pred_region
      %62 = dma.done [#allocation6], 16
    $region25: #{tpu_custom_call.1} parent=1 // pred_fallthru
      _
    // Predicated region
    $region26: #{tpu_custom_call.1} parent=1 // pred_check
      _
    $region27: #{tpu_custom_call.1} parent=1 // pred_check_branch
      %64 = sbr.rel (0) target = $region29
    $region28: #{tpu_custom_call.1} parent=1 // pred_region
      %65 = dma.done [#allocation6], 16
    $region29: #{tpu_custom_call.1} parent=1 // pred_fallthru
      _
    // Predicated region
    $region30: #{tpu_custom_call.1} parent=1 // pred_check
      _
    $region31: #{tpu_custom_call.1} parent=1 // pred_check_branch
      %67 = sbr.rel (0) target = $region33
    $region32: #{tpu_custom_call.1} parent=1 // pred_region
      %68 = dma.done [#allocation9], 256
    $region33: #{tpu_custom_call.1} parent=1 // pred_fallthru
      _
    %v70 = vld [vmem:[#allocation2] sm:$0xff]
    %v71 = vld [vmem:[#allocation2 + $0x8] sm:$0xff]
    %v72 = vld [vmem:[#allocation5] sm:$0x1]
    %v73 = vld [vmem:[#allocation7] sm:$0x1]
    %vm74 = vcmask 261120
    %v75 = vsel %vm74, %v70, 0.0
    %76 = vadd.xlane.f32.xlu0 %v75
    %v77 = vpop.xlane.xlu0 %76
    %v78 = vsel %vm74, %v71, 0.0
    %79 = vadd.xlane.f32.xlu0 %v78
    %v80 = vpop.xlane.xlu0 %79
    %v81 = vrcp.pop 32.0
    %v82 = vmul.f32 %v77, %v81
    %v83 = vmul.f32 %v80, %v81
    %v84 = vsub.f32 %v70, %v82
    %v85 = vsub.f32 %v71, %v83
    %v86 = vmul.f32 %v84, %v84
    %v87 = vmul.f32 %v85, %v85
    %v88 = vsel %vm74, %v86, 0.0
    %89 = vadd.xlane.f32.xlu0 %v88
    %v90 = vpop.xlane.xlu0 %89
    %v91 = vsel %vm74, %v87, 0.0
    %92 = vadd.xlane.f32.xlu0 %v91
    %v93 = vpop.xlane.xlu0 %92
    %v94 = vmul.f32 %v90, %v81
    %v95 = vmul.f32 %v93, %v81
    %v96 = vadd.f32 %v94, 1e-05
    %v97 = vadd.f32 %v95, 1e-05
    %v98 = vrsqrt.pop %v96
    %v99 = vmul.f32 %v96, %v98
    %vm100 = vcmp.eq.f32.partialorder %v96, inf
    %v101 = vsel %vm100, %v96, %v99
    %vm102 = vcmp.eq.f32.partialorder %v96, 0.0
    %v103 = vand.u32 %v96, 2147483648
    %v104 = vsel %vm102, %v103, %v101
    %v105 = vrsqrt.pop %v97
    %v106 = vmul.f32 %v97, %v105
    %vm107 = vcmp.eq.f32.partialorder %v97, inf
    %v108 = vsel %vm107, %v97, %v106
    %vm109 = vcmp.eq.f32.partialorder %v97, 0.0
    %v110 = vand.u32 %v97, 2147483648
    %v111 = vsel %vm109, %v110, %v108
    %v112 = vrcp.pop %v104
    %v113 = vmul.f32 %v84, %v112
    %v114 = vrcp.pop %v111
    %v115 = vmul.f32 %v85, %v114
    %v117 = vlaneseq
    %v118 = vshrl.u32 %v117, 7
    %v119 = vsub.s32 0, %v118
    %v120 = vrot.slane %v72, %v119
    %v122 = vmul.f32 %v120, %v113
    %v123 = vmul.f32 %v120, %v115
    %v125 = vlaneseq
    %v126 = vshrl.u32 %v125, 7
    %v127 = vsub.s32 0, %v126
    %v128 = vrot.slane %v73, %v127
    %v130 = vadd.f32 %v122, %v128
    %v131 = vadd.f32 %v123, %v128
    %v132 = vpack.c.bf16 %v131, %v130
    %v133 = vld [vmem:[#allocation8] sm:$0xf]
    %v134 = vld [vmem:[#allocation8 + $0x4] sm:$0xf]
    %v135 = vld [vmem:[#allocation8 + $0x8] sm:$0xf]
    %v136 = vld [vmem:[#allocation8 + $0xc] sm:$0xf]
    %v141 = vunpack.c.l.b16 %v133
    %v142 = vunpack.c.l.b16 %v134
    %v143 = vunpack.c.l.b16 %v135
    %v144 = vunpack.c.l.b16 %v136
    %v145 = vpack.c.b16 %v142, %v141
    %v146 = vpack.c.b16 %v144, %v143
    %v150 = vsel %vm74, %v132, 0
    %152 = vmatprep.subr.bf16.mxu0 0
    %153 = vmatpush1.bf16.msra.mxu0 %v145
    %154 = vmatprep.subr.bf16.mxu0 0
    %155 = vmatpush1.bf16.msra.mxu0 %v146
    %156 = vmatprep.subr.bf16.mxu0 0
    %157 = vmatpush1.bf16.msra.mxu0 0
    %158 = vmatprep.subr.bf16.mxu0 0
    %159 = vmatpush1.bf16.msra.mxu0 0
    %160 = vmatprep.subr.bf16.mxu0 0
    %161 = vmatpush1.bf16.msra.mxu0 0
    %162 = vmatprep.subr.bf16.mxu0 0
    %163 = vmatpush1.bf16.msra.mxu0 0
    %164 = vmatprep.subr.bf16.mxu0 0
    %165 = vmatpush1.bf16.msra.mxu0 0
    %166 = vmatprep.subr.bf16.mxu0 0
    %167 = vmatpush1.bf16.msra.mxu0 0
    %168 = vmatprep.subr.bf16.mxu0 0
    %169 = vmatpush1.bf16.msra.mxu0 0
    %170 = vmatprep.subr.bf16.mxu0 0
    %171 = vmatpush1.bf16.msra.mxu0 0
    %172 = vmatprep.subr.bf16.mxu0 0
    %173 = vmatpush1.bf16.msra.mxu0 0
    %174 = vmatprep.subr.bf16.mxu0 0
    %175 = vmatpush1.bf16.msra.mxu0 0
    %176 = vmatprep.subr.bf16.mxu0 0
    %177 = vmatpush1.bf16.msra.mxu0 0
    %178 = vmatprep.subr.bf16.mxu0 0
    %179 = vmatpush1.bf16.msra.mxu0 0
    %180 = vmatprep.subr.bf16.mxu0 0
    %181 = vmatpush1.bf16.msra.mxu0 0
    %182 = vmatprep.subr.bf16.mxu0 0
    %183 = vmatpush1.bf16.msra.mxu0 0
    %184 = vmatprep.mubr.bf16.mxu0 0
    %185 = vmatmul.mubr.bf16.gmra.mrb[0].mxu0 %v150
    %v186 = vpop.f32.mrb[0].mxu0
    %v187 = vadd.f32 0.0, %v186
    %v188 = vpop.f32.mrb[0].mxu0
    %v189 = vpop.f32.mrb[0].mxu0
    %v190 = vadd.f32 0.0, %v189
    %v191 = vpop.f32.mrb[0].mxu0
    %192 = vdwg.mxu0
    %v193 = vpack.c.bf16 %v190, %v187
    %v195 = vunpack.c.l.b16 %v193
    %v196 = vunpack.c.h.b16 %v193
    %v197 = vpack.c.b16 %v195, %v195
    %v198 = vpack.c.b16 %v196, %v196
    %vm201 = vcmask 781312
    %202 = vst.msk [vmem:[#allocation10] sm:$0xf] %vm201, %v197
    %203 = vst.msk [vmem:[#allocation10 + $0x4] sm:$0xf] %vm201, %v198
    // Predicated region
    $region34: #{tpu_custom_call.1} parent=1 // pred_check
      _
    $region35: #{tpu_custom_call.1} parent=1 // pred_check_branch
      %205 = sbr.rel (0) target = $region37
    $region36: #{tpu_custom_call.1} parent=1 // pred_region
      %s207 = ssub.s32 128, 128
      %208 = vsyncadd [#allocation4], %s207
      %s209 = sshll.u32 [#allocation10], 4
      %s210 = int_to_ptr.vmem [resolvable:$true] %s209
      %215 = dma.vmem_to_hbm [thread:$0]  %s210, 128, %s4, [#allocation4], 64, 64, 4
    $region37: #{tpu_custom_call.1} parent=1 // pred_fallthru
      _
    // Predicated region
    $region38: #{tpu_custom_call.1} parent=1 // pred_check
      _
    $region39: #{tpu_custom_call.1} parent=1 // pred_check_branch
      %217 = sbr.rel (0) target = $region41
    $region40: #{tpu_custom_call.1} parent=1 // pred_region
      %218 = dma.done [#allocation4], 128
    $region41: #{tpu_custom_call.1} parent=1 // pred_fallthru
      _
    %219 = vsyncpa [#allocation3], 1
    %220 = vsyncpa [#allocation6], 1
    %221 = vsyncpa [#allocation9], 1
    %222 = vsyncpa [#allocation4], 1

</llo_original>
